<compile_context>
chip_gen: v5e
topology: v5e:2x2
jax: 0.10.0
libtpu: 0.0.40
codegen_flags: <defaults>
</compile_context>

<pallas_src>
import functools
import math

import jax
import jax.numpy as jnp
from jax import lax
from jax.experimental import pallas as pl
from jax.experimental.pallas import tpu as pltpu

N_FEATURES = 3
_TL_TARGET = 256                       # length-tile rows (multiple of 16)
_VMEM_LIMIT = 32 * 1024 * 1024         # comfortable on v5e / v6e / v7x


# ---------------------------------------------------------------------------
# In-kernel fused conv tile:  sum_k  x[tap k] @ w[k]  + bias   (f32 accumulate)
# ---------------------------------------------------------------------------
def _conv_tile(x_ref, w_ref, b_ref, base, *, n_taps, tl, pair_taps):
    # One aligned dynamic load of the (tl + n_taps - 1)-row window; taps are
    # static slices of that value (avoids unaligned dynamic sublane offsets on
    # the packed bf16 ref).
    window = x_ref[0, pl.ds(base, tl + n_taps - 1), :]

    def tap(k):
        return window[k:k + tl, :]

    acc = None
    k = 0
    while k < n_taps:
        if pair_taps and k + 1 < n_taps:
            xa = jnp.concatenate([tap(k), tap(k + 1)], axis=-1)     # (tl, 2*Cin)
            wk = jnp.concatenate([w_ref[k], w_ref[k + 1]], axis=0)  # (2*Cin, Cout)
            k += 2
        else:
            xa = tap(k)
            wk = w_ref[k]
            k += 1
        part = jnp.dot(xa, wk, preferred_element_type=jnp.float32)
        acc = part if acc is None else acc + part
    return acc + b_ref[...]                                          # (tl, Cout) f32


def _conv_act_kernel(x_ref, w_ref, b_ref, o_ref, *, n_taps, tl, slope, pair_taps):
    t = pl.program_id(1)
    base = t * tl
    if tl % 8 == 0:
        base = pl.multiple_of(base, 8)
    y = _conv_tile(x_ref, w_ref, b_ref, base,
                   n_taps=n_taps, tl=tl, pair_taps=pair_taps)
    y = jnp.where(y >= 0, y, slope * y)                              # LeakyReLU
    o_ref[0] = y.astype(o_ref.dtype)


def _conv_act_mean_proj_kernel(x_ref, w_ref, b_ref, wf_ref, o_ref, acc_ref, *,
                               n_taps, tl, slope, lo, inv_lo, pair_taps):
    t = pl.program_id(1)

    @pl.when(t == 0)
    def _init():
        acc_ref[...] = jnp.zeros_like(acc_ref)

    base = t * tl
    if tl % 8 == 0:
        base = pl.multiple_of(base, 8)
    y = _conv_tile(x_ref, w_ref, b_ref, base,
                   n_taps=n_taps, tl=tl, pair_taps=pair_taps)
    y = jnp.where(y >= 0, y, slope * y)                              # LeakyReLU
    row = t * tl + lax.broadcasted_iota(jnp.int32, (tl, 1), 0)
    y = jnp.where(row < lo, y, 0.0)                                  # mask tile padding
    acc_ref[...] += jnp.sum(y, axis=0, keepdims=True)                # (1, Cout)

    @pl.when(t == pl.num_programs(1) - 1)
    def _fin():
        mean = acc_ref[...] * inv_lo                                 # mean over length
        # fused 1x1 conv (convf weight) -> scalar per batch
        o_ref[0] = jnp.sum(mean * wf_ref[...], axis=-1, keepdims=True)


# ---------------------------------------------------------------------------
# Wrappers: geometry, stride folding, pallas_call plumbing
# ---------------------------------------------------------------------------
def _layer_geometry(L, K, stride, pad, n_taps):
    lo = (L + 2 * pad - K) // stride + 1
    if lo <= _TL_TARGET:
        tl, n_tiles = lo, 1
    else:
        tl = _TL_TARGET
        n_tiles = -(-lo // tl)
    lo_pad = tl * n_tiles
    l_in = lo_pad + n_taps - 1             # folded rows the kernel may touch
    right = stride * l_in - pad - L        # extra zero rows on the right
    return lo, tl, n_tiles, lo_pad, l_in, right


def _fold_input(x, pad, right, stride, l_in):
    B, L, cin = x.shape
    xp = jnp.pad(x, ((0, 0), (pad, right), (0, 0)))
    return xp.reshape(B, l_in, stride * cin)   # fold `stride` rows into channels


def fused_conv1d(x, w_eff, bias, *, K, stride, pad, slope=0.2):
    """LeakyReLU(Conv1d(x)) in NLC layout.

    x: (B, L, Cin) bf16; w_eff: (n_taps, stride*Cin, Cout) bf16 (stride-folded,
    see _stride_fold_weight); bias: (1, Cout) f32.  Returns (B, Lo, Cout)."""
    B, L, _ = x.shape
    n_taps, cin_eff, cout = w_eff.shape
    lo, tl, n_tiles, lo_pad, l_in, right = _layer_geometry(L, K, stride, pad, n_taps)
    xf = _fold_input(x, pad, right, stride, l_in)
    pair = (cin_eff == 128)                    # reach 256-deep MXU contraction

    out = pl.pallas_call(
        functools.partial(_conv_act_kernel, n_taps=n_taps, tl=tl,
                          slope=slope, pair_taps=pair),
        out_shape=jax.ShapeDtypeStruct((B, lo_pad, cout), x.dtype),
        grid=(B, n_tiles),
        in_specs=[
            pl.BlockSpec((1, l_in, cin_eff), lambda b, t: (b, 0, 0)),
            pl.BlockSpec((n_taps, cin_eff, cout), lambda b, t: (0, 0, 0)),
            pl.BlockSpec((1, cout), lambda b, t: (0, 0)),
        ],
        out_specs=pl.BlockSpec((1, tl, cout), lambda b, t: (b, t, 0)),
        compiler_params=pltpu.CompilerParams(
            dimension_semantics=("parallel", "parallel"),
            vmem_limit_bytes=_VMEM_LIMIT),
    )(xf, w_eff, bias)
    return out if lo_pad == lo else out[:, :lo, :]


def fused_conv1d_mean_proj(x, w_eff, bias, w_final, *, K, stride, pad, slope=0.2):
    """mean_L( LeakyReLU(Conv1d(x)) ) @ w_final  ->  (B, 1) f32.
    (Bias of the final 1x1 conv is added by the caller.)"""
    B, L, _ = x.shape
    n_taps, cin_eff, cout = w_eff.shape
    lo, tl, n_tiles, lo_pad, l_in, right = _layer_geometry(L, K, stride, pad, n_taps)
    xf = _fold_input(x, pad, right, stride, l_in)
    pair = (cin_eff == 128)

    out = pl.pallas_call(
        functools.partial(_conv_act_mean_proj_kernel, n_taps=n_taps, tl=tl,
                          slope=slope, lo=lo, inv_lo=1.0 / lo, pair_taps=pair),
        out_shape=jax.ShapeDtypeStruct((B, 1, 1), jnp.float32),
        grid=(B, n_tiles),
        in_specs=[
            pl.BlockSpec((1, l_in, cin_eff), lambda b, t: (b, 0, 0)),
            pl.BlockSpec((n_taps, cin_eff, cout), lambda b, t: (0, 0, 0)),
            pl.BlockSpec((1, cout), lambda b, t: (0, 0)),
            pl.BlockSpec((1, cout), lambda b, t: (0, 0)),
        ],
        out_specs=pl.BlockSpec((1, 1, 1), lambda b, t: (b, 0, 0)),
        scratch_shapes=[pltpu.VMEM((1, cout), jnp.float32)],
        compiler_params=pltpu.CompilerParams(
            dimension_semantics=("parallel", "arbitrary"),
            vmem_limit_bytes=_VMEM_LIMIT),
    )(xf, w_eff, bias, w_final)
    return out.reshape(B, 1)


# ---------------------------------------------------------------------------
# Parameter construction (deterministic, PyTorch-style uniform fan-in bounds)
# ---------------------------------------------------------------------------
def _init_conv(key, cin, cout, k):
    kw, kb = jax.random.split(key)
    bound = 1.0 / math.sqrt(cin * k)
    w = jax.random.uniform(kw, (cout, cin, k), jnp.float32, -bound, bound)
    b = jax.random.uniform(kb, (cout,), jnp.float32, -bound, bound)
    return w, b


def _block_diag_merge(w1, b1, w2, b2):
    """Merge two parallel convs into one block-diagonal conv (torch layout)."""
    c1o, c1i, k = w1.shape
    c2o, c2i, _ = w2.shape
    w = jnp.zeros((c1o + c2o, c1i + c2i, k), w1.dtype)
    w = w.at[:c1o, :c1i, :].set(w1)
    w = w.at[c1o:, c1i:, :].set(w2)
    return w, jnp.concatenate([b1, b2])


def _stride_fold_weight(w, stride):
    """(Cout, Cin, K) torch layout -> (n_taps, stride*Cin, Cout) bf16 so that a
    stride-s conv becomes a stride-1 conv on the row-folded input."""
    cout, cin, k = w.shape
    n_taps = -(-k // stride)
    wt = jnp.transpose(w, (2, 1, 0))                             # (K, Cin, Cout)
    wt = jnp.pad(wt, ((0, n_taps * stride - k), (0, 0), (0, 0)))
    wt = wt.reshape(n_taps, stride * cin, cout)
    return wt.astype(jnp.bfloat16)


class Disc:
    """JAX/Pallas port of the PyTorch Disc discriminator (forward pass)."""

    # raw torch-style convs: (name, cin, cout, kernel, stride, pad)
    _RAW = [
        ("convp1", N_FEATURES, 32, 3, 1, 1),
        ("convp2", 32, 64, 3, 1, 1),
        ("convxy1", 2, 32, 3, 1, 1),
        ("convxy2", 32, 64, 3, 1, 1),
        ("conv1", 128, 128, 17, 1, 8),
        ("conv2", 128, 128, 9, 1, 4),
        ("db1", 128, 256, 3, 2, 1),
        ("db2", 256, 512, 3, 2, 1),
        ("convf", 512, 1, 1, 1, 0),
    ]

    def __init__(self, ndf, seq_len, encoded_dim, key):
        del ndf, seq_len, encoded_dim     # unused by the reference forward pass
        raw = {}
        for i, (name, cin, cout, k, s, p) in enumerate(self._RAW):
            raw[name] = _init_conv(jax.random.fold_in(key, i), cin, cout, k)

        # Merge the tiny p / xy branches into block-diagonal convs.
        # Output ordering [p, xy] matches torch.cat([p, xy], dim=1).
        w_e1, b_e1 = _block_diag_merge(*raw["convp1"], *raw["convxy1"])
        w_e2, b_e2 = _block_diag_merge(*raw["convp2"], *raw["convxy2"])

        def pack(w, b, k, s, p):
            return dict(w=_stride_fold_weight(w, s),
                        b=b.reshape(1, -1).astype(jnp.float32),
                        K=k, stride=s, pad=p)

        self.layers = [
            pack(w_e1, b_e1, 3, 1, 1),            # convp1 || convxy1  -> 64 ch
            pack(w_e2, b_e2, 3, 1, 1),            # convp2 || convxy2  -> 128 ch
            pack(*raw["conv1"], 17, 1, 8),
            pack(*raw["conv2"], 9, 1, 4),
            pack(*raw["db1"], 3, 2, 1),
        ]
        self.db2 = pack(*raw["db2"], 3, 2, 1)
        wf, bf = raw["convf"]
        self.wf = wf.reshape(1, 512).astype(jnp.float32)   # 1x1 conv weight, lane-dense
        self.bf = bf.astype(jnp.float32)                   # (1,)

    def __call__(self, x_ncl):
        # x_ncl: PyTorch-style (B, C, L) with C >= n_features + 2
        # first 5 channels = [p (3), xy (2)]; the fused first layer consumes them directly
        x = jnp.transpose(x_ncl[:, :N_FEATURES + 2, :], (0, 2, 1))   # (B, L, 5)
        h = x.astype(jnp.bfloat16)
        for lyr in self.layers:
            h = fused_conv1d(h, lyr["w"], lyr["b"],
                             K=lyr["K"], stride=lyr["stride"], pad=lyr["pad"])
        # db2 + convf(1x1) + mean-over-length fused in one kernel
        out = fused_conv1d_mean_proj(h, self.db2["w"], self.db2["b"], self.wf,
                                     K=self.db2["K"], stride=self.db2["stride"],
                                     pad=self.db2["pad"])
        return out + self.bf[None, :]                       # add convf bias -> (B, 1)


if __name__ == "__main__":
    key = jax.random.PRNGKey(0)
    k_x, k_params = jax.random.split(key)

    B, C, L = 2, N_FEATURES + 2, 16                   # (batch, channels, seq)
    x = jax.random.normal(k_x, (B, C, L), jnp.float32)

    model = Disc(ndf=32, seq_len=L, encoded_dim=8, key=k_params)
    y = jax.block_until_ready(model(x))

    assert y.shape == (B, 1), y.shape
    assert bool(jnp.all(jnp.isfinite(y)))
    print("KERNEL_OK")
</pallas_src>

<mosaic_0001>
module attributes {stable_mosaic.version = 11 : i64} {
  func.func @_conv_act_kernel(%arg0: i32, %arg1: i32, %arg2: memref<1x18x5xbf16, #tpu.memory_space<vmem>>, %arg3: memref<3x5x64xbf16, #tpu.memory_space<vmem>>, %arg4: memref<1x64xf32, #tpu.memory_space<vmem>>, %arg5: memref<1x16x64xbf16, #tpu.memory_space<vmem>>) attributes {dimension_semantics = [#tpu.dimension_semantics<parallel>, #tpu.dimension_semantics<parallel>], iteration_bounds = array<i64: 2, 1>, scalar_prefetch = 0 : i64, scratch_operands = 0 : i64, tpu.core_type = #tpu.core_type<tc>, window_params = [{transform_indices = @transform_0, window_bounds = array<i64: 1, 18, 5>}, {pipeline_mode = #tpu.pipeline_mode<synchronous>, transform_indices = @transform_1, window_bounds = array<i64: 3, 5, 64>}, {pipeline_mode = #tpu.pipeline_mode<synchronous>, transform_indices = @transform_2, window_bounds = array<i64: 1, 64>}, {transform_indices = @transform_3, window_bounds = array<i64: 1, 16, 64>}]} {
    %c16_i32 = arith.constant 16 : i32
    %0 = arith.muli %arg1, %c16_i32 : i32
    %1 = tpu.assume_multiple %0, 8 : i32
    %c0 = arith.constant 0 : index
    %2 = arith.index_cast %1 : i32 to index
    %c0_0 = arith.constant 0 : index
    %3 = vector.load %arg2[%c0, %2, %c0_0] : memref<1x18x5xbf16, #tpu.memory_space<vmem>>, vector<1x18x5xbf16>
    %4 = vector.shape_cast %3 : vector<1x18x5xbf16> to vector<18x5xbf16>
    %5 = vector.extract_strided_slice %4 {offsets = [0, 0], sizes = [16, 5], strides = [1, 1]} : vector<18x5xbf16> to vector<16x5xbf16>
    %c0_1 = arith.constant 0 : index
    %c0_2 = arith.constant 0 : index
    %c0_3 = arith.constant 0 : index
    %6 = vector.load %arg3[%c0_1, %c0_2, %c0_3] : memref<3x5x64xbf16, #tpu.memory_space<vmem>>, vector<1x5x64xbf16>
    %7 = vector.shape_cast %6 : vector<1x5x64xbf16> to vector<5x64xbf16>
    %cst = arith.constant dense<0.000000e+00> : vector<16x64xf32>
    %8 = tpu.matmul %5, %7, %cst {dimension_numbers = #tpu.dot_dimension_numbers<[1], [0], [0], [1], [0, 0, 1, 1], [], []>} : vector<16x5xbf16>, vector<5x64xbf16>, vector<16x64xf32> -> vector<16x64xf32>
    %9 = vector.extract_strided_slice %4 {offsets = [1, 0], sizes = [16, 5], strides = [1, 1]} : vector<18x5xbf16> to vector<16x5xbf16>
    %c1 = arith.constant 1 : index
    %c0_4 = arith.constant 0 : index
    %c0_5 = arith.constant 0 : index
    %10 = vector.load %arg3[%c1, %c0_4, %c0_5] : memref<3x5x64xbf16, #tpu.memory_space<vmem>>, vector<1x5x64xbf16>
    %11 = vector.shape_cast %10 : vector<1x5x64xbf16> to vector<5x64xbf16>
    %cst_6 = arith.constant dense<0.000000e+00> : vector<16x64xf32>
    %12 = tpu.matmul %9, %11, %cst_6 {dimension_numbers = #tpu.dot_dimension_numbers<[1], [0], [0], [1], [0, 0, 1, 1], [], []>} : vector<16x5xbf16>, vector<5x64xbf16>, vector<16x64xf32> -> vector<16x64xf32>
    %13 = arith.addf %8, %12 : vector<16x64xf32>
    %14 = vector.extract_strided_slice %4 {offsets = [2, 0], sizes = [16, 5], strides = [1, 1]} : vector<18x5xbf16> to vector<16x5xbf16>
    %c2 = arith.constant 2 : index
    %c0_7 = arith.constant 0 : index
    %c0_8 = arith.constant 0 : index
    %15 = vector.load %arg3[%c2, %c0_7, %c0_8] : memref<3x5x64xbf16, #tpu.memory_space<vmem>>, vector<1x5x64xbf16>
    %16 = vector.shape_cast %15 : vector<1x5x64xbf16> to vector<5x64xbf16>
    %cst_9 = arith.constant dense<0.000000e+00> : vector<16x64xf32>
    %17 = tpu.matmul %14, %16, %cst_9 {dimension_numbers = #tpu.dot_dimension_numbers<[1], [0], [0], [1], [0, 0, 1, 1], [], []>} : vector<16x5xbf16>, vector<5x64xbf16>, vector<16x64xf32> -> vector<16x64xf32>
    %18 = arith.addf %13, %17 : vector<16x64xf32>
    %c0_10 = arith.constant 0 : index
    %c0_11 = arith.constant 0 : index
    %19 = vector.load %arg4[%c0_10, %c0_11] : memref<1x64xf32, #tpu.memory_space<vmem>>, vector<1x64xf32>
    %20 = vector.broadcast %19 : vector<1x64xf32> to vector<16x64xf32>
    %21 = arith.addf %18, %20 : vector<16x64xf32>
    %cst_12 = arith.constant 0.000000e+00 : f32
    %22 = vector.broadcast %cst_12 : f32 to vector<16x64xf32>
    %23 = arith.cmpf oge, %21, %22 : vector<16x64xf32>
    %cst_13 = arith.constant 2.000000e-01 : f32
    %24 = vector.broadcast %cst_13 : f32 to vector<16x64xf32>
    %25 = arith.mulf %24, %21 : vector<16x64xf32>
    %26 = arith.select %23, %21, %25 : vector<16x64xi1>, vector<16x64xf32>
    %27 = arith.truncf %26 : vector<16x64xf32> to vector<16x64xbf16>
    %c0_14 = arith.constant 0 : index
    %c0_15 = arith.constant 0 : index
    %c0_16 = arith.constant 0 : index
    %28 = vector.load %arg5[%c0_14, %c0_15, %c0_16] : memref<1x16x64xbf16, #tpu.memory_space<vmem>>, vector<1x16x64xbf16>
    %29 = vector.shape_cast %28 : vector<1x16x64xbf16> to vector<16x64xbf16>
    %30 = vector.shape_cast %27 : vector<16x64xbf16> to vector<1x16x64xbf16>
    tpu.vector_store %arg5[%c0_14, %c0_15, %c0_16], %30 {strides = array<i32>} : memref<1x16x64xbf16, #tpu.memory_space<vmem>>, vector<1x16x64xbf16>,
    return
  }
  func.func @transform_0(%arg0: i32, %arg1: i32) -> (i32, i32, i32) {
    %c0_i32 = arith.constant 0 : i32
    %c0_i32_0 = arith.constant 0 : i32
    %c0_i32_1 = arith.constant 0 : i32
    return %arg0, %c0_i32, %c0_i32_0 : i32, i32, i32
  }
  func.func @transform_1(%arg0: i32, %arg1: i32) -> (i32, i32, i32) {
    %c0_i32 = arith.constant 0 : i32
    %c0_i32_0 = arith.constant 0 : i32
    %c0_i32_1 = arith.constant 0 : i32
    %c0_i32_2 = arith.constant 0 : i32
    return %c0_i32, %c0_i32_0, %c0_i32_1 : i32, i32, i32
  }
  func.func @transform_2(%arg0: i32, %arg1: i32) -> (i32, i32) {
    %c0_i32 = arith.constant 0 : i32
    %c0_i32_0 = arith.constant 0 : i32
    %c0_i32_1 = arith.constant 0 : i32
    return %c0_i32, %c0_i32_0 : i32, i32
  }
  func.func @transform_3(%arg0: i32, %arg1: i32) -> (i32, i32, i32) {
    %c0_i32 = arith.constant 0 : i32
    %c0_i32_0 = arith.constant 0 : i32
    return %arg0, %arg1, %c0_i32 : i32, i32, i32
  }
}

</mosaic_0001>

<llo_original>
// kernel: tpu_custom_call.1
$region0: #{tpu_custom_call.1}
  #allocation0 [shape = 'u32[]', space=smem, size = 0x4, offset = 0x4, fixed_abs, tag = 'smem constant byte address 0x4 - core index']
  #allocation1 [shape = 'u32[72,128]{1,0:T(1,128)}', space=vmem, size = 0x9000, scoped, tag = 'internal scratch']
  %s0 = inlined_call_operand.vmem [shape: bf16[2,18,5], index: 0, kind: input, shape index: {}]
  %s1 = inlined_call_operand.vmem [shape: bf16[3,5,64], index: 1, kind: input, shape index: {}]
  %s2 = inlined_call_operand.vmem [shape: f32[1,64], index: 2, kind: input, shape index: {}]
  %s3 = inlined_call_operand.hbm [shape: bf16[2,16,64], index: 3, kind: output, shape index: {}]
  %s4 = sld [smem:[#allocation0]]
  $region45: #{tpu_custom_call.1} parent=0
    _
  %s6 = ssub.s32 1, %s4
  %s7 = scalar_select 0, %s6, %s4
  $region1: #{tpu_custom_call.1} parent=0
    #allocation2 [shape = 'u8[8192]{0}', space=vmem, size = 0x2000, scoped, tag = 'output window, operand 0']
    #allocation3 [shape = 's32[2]{0}', space=sflag, size = 0x8, scoped, tag = 'scoped memory for tpu_custom_call.1']
    %8 = vsyncpa [#allocation3], 0
    %s9 = scalar_lea.sflag [#allocation3], 1
    %10 = vsyncpa %s9, 0
    loop: start=0, step=1, limit=4
    $region2: #{tpu_custom_call.1} parent=1 // loop_pre_header
      _
    $region3: #{tpu_custom_call.1} parent=1 // loop_header
      %s12 = sphi 0, %s16
      %p13 = scmp.ge.s32.totalorder %s12, 4
      %s19 = sphi 0, %s31
      %s20 = sphi 0, %s27
      %s21 = sphi 0, %s19
      %s22 = sphi 0, %s20
      %s23 = sphi 0, %s21
      %s24 = sphi 0, %s22
      %s34 = sphi 0, %s36
      %s37 = sphi 0, %s34
      %s38 = sphi 0, %s37
      %s54 = sphi 0, %s38
      %s58 = sphi 0, %s58
      %s60 = sphi 0, %s58
      %s61 = sphi 0, %s60
      %s75 = sphi 0, %s61
      %s79 = sphi 0, %s79
      %s81 = sphi 0, %s79
      %s82 = sphi 0, %s81
      %s96 = sphi 0, %s82
      %s104 = sphi 0, %s106
      %s107 = sphi 0, %s104
      %s108 = sphi 0, %s107
      %s124 = sphi 0, %s108
    $region4: #{tpu_custom_call.1} parent=1 // loop_header_branch
      %15 = sbr.rel (%p13) target = $region8
    $region5: #{tpu_custom_call.1} parent=1 // loop_body
      %s17 = ssub.s32 %s12, 1
      %s18 = ssub.s32 %s12, 2
      %s25 = sadd.s32 1, %s20
      %p26 = scmp.ge.s32.totalorder %s25, 1
      %s27 = scalar_select %p26, 0, %s25
      %s28 = sadd.s32 1, %s19
      %s29 = scalar_select %p26, %s28, %s19
      %p30 = scmp.ge.s32.totalorder %s29, 2
      %s31 = scalar_select %p30, 0, %s29
      %s32 = ssub.s32 %s19, %s31
      %p33 = scmp.eq.s32.totalorder %s32, 0
      %s35 = sadd.s32 %s34, 1
      %s36 = scalar_select %p33, %s34, %s35
      %p39 = pneg %p33
      %p40 = scmp.eq.s32.totalorder %s12, 1
      %p41 = por %p39, %p40
      %p42 = scmp.ne.s32.totalorder %s34, %s37
      %p43 = scmp.eq.s32.totalorder %s12, 0
      %p44 = por %p42, %p43
      %p45 = scmp.ne.s32.totalorder %s34, %s37
      %p46 = scmp.eq.s32.totalorder %s17, 1
      %p47 = por %p45, %p46
      %p48 = scmp.ne.s32.totalorder %s37, %s38
      %p49 = scmp.eq.s32.totalorder %s17, 0
      %p50 = por %p48, %p49
      %p51 = scmp.ne.s32.totalorder %s37, %s38
      %p52 = scmp.eq.s32.totalorder %s18, 1
      %p53 = por %p51, %p52
      %p55 = scmp.ne.s32.totalorder %s38, %s54
      %p56 = scmp.eq.s32.totalorder %s18, 0
      %p57 = por %p55, %p56
      %s59 = sadd.s32 %s58, 1
      %p62 = scmp.eq.s32.totalorder %s12, 1
      %p63 = scmp.ne.s32.totalorder %s58, %s60
      %p64 = scmp.eq.s32.totalorder %s12, 0
      %p65 = por %p63, %p64
      %p66 = scmp.ne.s32.totalorder %s58, %s60
      %p67 = scmp.eq.s32.totalorder %s17, 1
      %p68 = por %p66, %p67
      %p69 = scmp.ne.s32.totalorder %s60, %s61
      %p70 = scmp.eq.s32.totalorder %s17, 0
      %p71 = por %p69, %p70
      %p72 = scmp.ne.s32.totalorder %s60, %s61
      %p73 = scmp.eq.s32.totalorder %s18, 1
      %p74 = por %p72, %p73
      %p76 = scmp.ne.s32.totalorder %s61, %s75
      %p77 = scmp.eq.s32.totalorder %s18, 0
      %p78 = por %p76, %p77
      %s80 = sadd.s32 %s79, 1
      %p83 = scmp.eq.s32.totalorder %s12, 1
      %p84 = scmp.ne.s32.totalorder %s79, %s81
      %p85 = scmp.eq.s32.totalorder %s12, 0
      %p86 = por %p84, %p85
      %p87 = scmp.ne.s32.totalorder %s79, %s81
      %p88 = scmp.eq.s32.totalorder %s17, 1
      %p89 = por %p87, %p88
      %p90 = scmp.ne.s32.totalorder %s81, %s82
      %p91 = scmp.eq.s32.totalorder %s17, 0
      %p92 = por %p90, %p91
      %p93 = scmp.ne.s32.totalorder %s81, %s82
      %p94 = scmp.eq.s32.totalorder %s18, 1
      %p95 = por %p93, %p94
      %p97 = scmp.ne.s32.totalorder %s82, %s96
      %p98 = scmp.eq.s32.totalorder %s18, 0
      %p99 = por %p97, %p98
      %s100 = ssub.s32 %s19, %s31
      %s101 = ssub.s32 %s20, %s27
      %s102 = sor.u32 %s100, %s101
      %p103 = scmp.eq.s32.totalorder %s102, 0
      %s105 = sadd.s32 %s104, 1
      %s106 = scalar_select %p103, %s104, %s105
      %p109 = pneg %p103
      %p110 = scmp.eq.s32.totalorder %s12, 1
      %p111 = por %p109, %p110
      %p112 = scmp.ne.s32.totalorder %s104, %s107
      %p113 = scmp.eq.s32.totalorder %s12, 0
      %p114 = por %p112, %p113
      %p115 = scmp.ne.s32.totalorder %s104, %s107
      %p116 = scmp.eq.s32.totalorder %s17, 1
      %p117 = por %p115, %p116
      %p118 = scmp.ne.s32.totalorder %s107, %s108
      %p119 = scmp.eq.s32.totalorder %s17, 0
      %p120 = por %p118, %p119
      %p121 = scmp.ne.s32.totalorder %s107, %s108
      %p122 = scmp.eq.s32.totalorder %s18, 1
      %p123 = por %p121, %p122
      %p125 = scmp.ne.s32.totalorder %s108, %s124
      %p126 = scmp.eq.s32.totalorder %s18, 0
      %p127 = por %p125, %p126
      %p128 = scmp.le.s32.totalorder 1, %s12
      %p129 = scmp.lt.s32.totalorder %s12, 3
      %p130 = pnand %p128, %p129
      %p131 = pneg %p130
      // Predicated region
      $region9: #{tpu_custom_call.1} parent=5 // pred_check
        _
      $region10: #{tpu_custom_call.1} parent=5 // pred_check_branch
        %133 = sbr.rel (%p130) target = $region12
      $region11: #{tpu_custom_call.1} parent=5 // pred_region
        %s134 = ssub.s32 %s12, 1
        // Predicated region
        $region13: #{tpu_custom_call.1} parent=11 // pred_check
          %p135 = pneg %p71
        $region14: #{tpu_custom_call.1} parent=11 // pred_check_branch
          %137 = sbr.rel (%p135) target = $region16
        $region15: #{tpu_custom_call.1} parent=11 // pred_region
          _
        $region16: #{tpu_custom_call.1} parent=11 // pred_fallthru
          _
        // Predicated region
        $region17: #{tpu_custom_call.1} parent=11 // pred_check
          %p138 = pneg %p92
        $region18: #{tpu_custom_call.1} parent=11 // pred_check_branch
          %140 = sbr.rel (%p138) target = $region20
        $region19: #{tpu_custom_call.1} parent=11 // pred_region
          _
        $region20: #{tpu_custom_call.1} parent=11 // pred_fallthru
          _
      $region12: #{tpu_custom_call.1} parent=5 // pred_fallthru
        _
      %p141 = scmp.lt.s32.totalorder %s12, 2
      // Predicated region
      $region21: #{tpu_custom_call.1} parent=5 // pred_check
        %p142 = pneg %p141
      $region22: #{tpu_custom_call.1} parent=5 // pred_check_branch
        %144 = sbr.rel (%p142) target = $region24
      $region23: #{tpu_custom_call.1} parent=5 // pred_region
        // Predicated region
        $region25: #{tpu_custom_call.1} parent=23 // pred_check
          %p145 = pneg %p44
        $region26: #{tpu_custom_call.1} parent=23 // pred_check_branch
          %147 = sbr.rel (%p145) target = $region28
        $region27: #{tpu_custom_call.1} parent=23 // pred_region
          %p148 = scmp.lt.s32.totalorder %s19, 1
          %s149 = scalar_select %p148, %s19, 1
          %s150 = smul.addr %s149, 3
          %s151 = smul.addr %s150, 4
          %s152 = scalar_lea.vmem %s0, %s151
        $region28: #{tpu_custom_call.1} parent=23 // pred_fallthru
          _
      $region24: #{tpu_custom_call.1} parent=5 // pred_fallthru
        _
      %p153 = scmp.le.s32.totalorder 1, %s12
      %p154 = scmp.lt.s32.totalorder %s12, 3
      %p155 = pnand %p153, %p154
      %p156 = pneg %p155
      // Predicated region
      $region29: #{tpu_custom_call.1} parent=5 // pred_check
        _
      $region30: #{tpu_custom_call.1} parent=5 // pred_check_branch
        %158 = sbr.rel (%p155) target = $region32
      $region31: #{tpu_custom_call.1} parent=5 // pred_region
        %s159 = ssub.s32 %s12, 1
        %p160 = scmp.lt.s32.totalorder %s21, 1
        %s161 = scalar_select %p160, %s21, 1
        %s162 = smul.addr %s161, 3
        %s163 = smul.addr %s162, 4
        %s164 = scalar_lea.vmem %s0, %s163
        %p165 = pneg %p50
        %p166 = pneg %p47
        %p167 = pneg %p71
        %p168 = pneg %p68
        %p169 = pneg %p92
        %p170 = pneg %p89
        %p171 = pneg %p120
        %p172 = pneg %p117
        %s173 = sand.u32 %s107, 1
        %s174 = scalar_lea.sflag [#allocation3], %s173
        %s175 = sand.u32 %s107, 1
        %s176 = smul.addr %s175, 8
        %s177 = scalar_lea.vmem [#allocation2], %s176
        %p178 = scmp.lt.s32.totalorder %s21, 1
        %s179 = scalar_select %p178, %s21, 1
        %s180 = smul.addr %s179, 3
        %s181 = smul.addr %s180, 4
        %s182 = scalar_lea.vmem %s0, %s181
        %s183 = smul.u32 2, %s22
        %s185 = smul.u32 %s22, 16
        %s186 = sshra.s32 %s185, 3
        %s187 = sand.u32 %s185, 7
        %s188 = smul.addr %s186, 4
        %s189 = scalar_lea.vmem %s182, %s188
        %v190 = vld [vmem:[%s189] sm:$0xf]
        %v191 = vld [vmem:[%s189 + $0x4] sm:$0xf]
        %v192 = vld [vmem:[%s189 + $0x8] sm:$0x1]
        %v193 = vld [vmem:[%s1] sm:$0x7]
        %s194 = scalar_lea.vmem %s1, 4
        %v195 = vld [vmem:[%s194] sm:$0x7]
        %v199 = vunpack.c.l.b16 %v190
        %v200 = vunpack.c.l.b16 %v191
        %v201 = vunpack.c.l.b16 %v192
        %v202 = vpack.c.b16 %v200, %v199
        %v203 = vpack.c.b16 %v201, %v201
        %vm204 = vsmask.f32 7424
        %v206 = vshrl.u32 %v202, 16
        %v208 = vshll.u32 %v202, 16
        %v210 = vrot.slane %v208, 1
        %v211 = vor.u32 %v206, %v210
        %v213 = vshll.u32 %v203, 16
        %v215 = vrot.slane %v213, 1
        %v216 = vsel %vm204, %v211, %v215
        %vm217 = vcmask 39936
        %v219 = vsel %vm217, %v216, 0
        %vm221 = vcmask 1041408
        %vm222 = vcmask 1042432
        %v223 = vsel %vm221, 4294967295, 65535
        %v224 = vsel %vm222, %v223, 0
        %v226 = vand.u32 %v195, %v224
        %228 = vmatpush.bf16.msra.mxu0 0
        %229 = vmatpush.bf16.msra.mxu0 0
        %230 = vmatpush.bf16.msra.mxu0 0
        %231 = vmatpush.bf16.msra.mxu0 0
        %232 = vmatpush.bf16.msra.mxu0 0
        %233 = vmatpush.bf16.msra.mxu0 0
        %234 = vmatpush.bf16.msra.mxu0 0
        %235 = vmatpush.bf16.msra.mxu0 %v226
        %236 = vmatmul.bf16.gmra.mxu0 %v219
        %v237 = vpop.f32.mrf.mxu0
        %v238 = vadd.f32 0.0, %v237
        %v239 = vpop.f32.mrf.mxu0
        %v240 = vadd.f32 0.0, %v239
        %241 = vdwg.mxu0
        %v242 = vsel %vm217, %v202, 0
        %v245 = vand.u32 %v193, %v224
        %247 = vmatpush.bf16.msra.mxu0 0
        %248 = vmatpush.bf16.msra.mxu0 0
        %249 = vmatpush.bf16.msra.mxu0 0
        %250 = vmatpush.bf16.msra.mxu0 0
        %251 = vmatpush.bf16.msra.mxu0 0
        %252 = vmatpush.bf16.msra.mxu0 0
        %253 = vmatpush.bf16.msra.mxu0 0
        %254 = vmatpush.bf16.msra.mxu0 %v245
        %255 = vmatmul.bf16.gmra.mxu0 %v242
        %v256 = vpop.f32.mrf.mxu0
        %v257 = vadd.f32 %v238, %v256
        %v258 = vpop.f32.mrf.mxu0
        %v259 = vadd.f32 %v240, %v258
        %260 = vdwg.mxu0
        %s261 = scalar_lea.vmem %s1, 8
        %v262 = vld [vmem:[%s261] sm:$0x7]
        %vm263 = vcmask 1046528
        %v264 = vrot.slane %v202, 1
        %v265 = vrot.slane %v203, 1
        %v266 = vsel %vm263, %v264, %v265
        %v268 = vsel %vm217, %v266, 0
        %v271 = vand.u32 %v262, %v224
        %273 = vmatpush.bf16.msra.mxu0 0
        %274 = vmatpush.bf16.msra.mxu0 0
        %275 = vmatpush.bf16.msra.mxu0 0
        %276 = vmatpush.bf16.msra.mxu0 0
        %277 = vmatpush.bf16.msra.mxu0 0
        %278 = vmatpush.bf16.msra.mxu0 0
        %279 = vmatpush.bf16.msra.mxu0 0
        %280 = vmatpush.bf16.msra.mxu0 %v271
        %281 = vmatmul.bf16.gmra.mxu0 %v268
        %v282 = vpop.f32.mrf.mxu0
        %v283 = vadd.f32 0.0, %v282
        %v284 = vpop.f32.mrf.mxu0
        %v285 = vadd.f32 0.0, %v284
        %286 = vdwg.mxu0
        %v287 = vadd.f32 %v257, %v283
        %v288 = vadd.f32 %v259, %v285
        %v289 = vld [vmem:[%s2] sm:$0x1]
        %v291 = vperm.slane %v289, 0
        %v293 = vadd.f32 %v287, %v291
        %v294 = vadd.f32 %v288, %v291
        %vm295 = vcmp.ge.f32.partialorder %v293, 0.0
        %vm296 = vcmp.ge.f32.partialorder %v294, 0.0
        %v297 = vmul.f32 %v293, 0.2
        %v298 = vmul.f32 %v294, 0.2
        %v299 = vsel %vm295, %v293, %v297
        %v300 = vsel %vm296, %v294, %v298
        %v301 = vpack.c.bf16 %v299, %v299
        %v302 = vpack.c.bf16 %v300, %v300
        %vm303 = vcmask 519168
        %304 = vst.msk [vmem:[%s177] sm:$0xf] %vm303, %v301
        %305 = vst.msk [vmem:[%s177 + $0x4] sm:$0xf] %vm303, %v302
        %s306 = sand.u32 %s107, 1
        %s307 = scalar_lea.sflag [#allocation3], %s306
        %s308 = sand.u32 %s107, 1
        %s309 = smul.addr %s308, 8
        %s310 = scalar_lea.vmem [#allocation2], %s309
        // Predicated region
        $region33: #{tpu_custom_call.1} parent=31 // pred_check
          %p311 = pneg %p117
        $region34: #{tpu_custom_call.1} parent=31 // pred_check_branch
          %313 = sbr.rel (%p311) target = $region36
        $region35: #{tpu_custom_call.1} parent=31 // pred_region
          %s314 = smul.u32 2, %s22
          %316 = vsyncadd %s307, 0
          %s317 = smul.addr %s21, 2
          %s318 = sadd.s32 %s314, %s317
          %s319 = smul.addr %s318, 4
          %s320 = scalar_lea.hbm %s3, %s319
          %s321 = sshll.u32 %s310, 4
          %s322 = int_to_ptr.vmem [resolvable:$true] %s321
          %s323 = sshll.u32 %s320, 4
          %s324 = int_to_ptr.hbm [resolvable:$true] %s323
          %329 = dma.vmem_to_hbm [thread:$0]  %s322, 128, %s324, %s307, 64, 64, 4
        $region36: #{tpu_custom_call.1} parent=31 // pred_fallthru
          _
      $region32: #{tpu_custom_call.1} parent=5 // pred_fallthru
        _
      %p330 = scmp.le.s32.totalorder 2, %s12
      // Predicated region
      $region37: #{tpu_custom_call.1} parent=5 // pred_check
        %p331 = pneg %p330
      $region38: #{tpu_custom_call.1} parent=5 // pred_check_branch
        %333 = sbr.rel (%p331) target = $region40
      $region39: #{tpu_custom_call.1} parent=5 // pred_region
        %s334 = ssub.s32 %s12, 2
        // Predicated region
        $region41: #{tpu_custom_call.1} parent=39 // pred_check
          %p335 = pneg %p123
        $region42: #{tpu_custom_call.1} parent=39 // pred_check_branch
          %337 = sbr.rel (%p335) target = $region44
        $region43: #{tpu_custom_call.1} parent=39 // pred_region
          %s338 = sand.u32 %s108, 1
          %s339 = scalar_lea.sflag [#allocation3], %s338
          %s340 = sand.u32 %s108, 1
          %s341 = smul.addr %s340, 8
          %s342 = scalar_lea.vmem [#allocation2], %s341
          %344 = dma.done %s339, 128
        $region44: #{tpu_custom_call.1} parent=39 // pred_fallthru
          _
      $region40: #{tpu_custom_call.1} parent=5 // pred_fallthru
        _
    $region6: #{tpu_custom_call.1} parent=1 // loop_footer
      %s16 = sadd.s32 1, %s12
    $region7: #{tpu_custom_call.1} parent=1 // loop_footer_branch
      %11 = sbr.rel target = $region3
    $region8: #{tpu_custom_call.1} parent=1 // loop_exit
      _
    %345 = vsyncpa [#allocation3], 1
    %s346 = scalar_lea.sflag [#allocation3], 1
    %347 = vsyncpa %s346, 1

</llo_original>
